<compile_context>
chip_gen: v7x
topology: tpu7x:2x2x1
jax: 0.10.0
libtpu: 0.0.40
codegen_flags: <defaults>
</compile_context>

<pallas_src>
import functools

import jax
import jax.numpy as jnp
from jax.experimental import pallas as pl
from jax.experimental.pallas import tpu as pltpu


def _self_output_kernel(hs_ref, res_ref, w_ref, b_ref, g_ref, beta_ref, o_ref,
                        *, eps):
    # Dense: x @ W (W pre-transposed outside).  Storage-dtype operands on the
    # MXU, f32 accumulation.
    y = jnp.dot(hs_ref[...], w_ref[...], preferred_element_type=jnp.float32)
    y = y + b_ref[...].astype(jnp.float32)

    # TODO(synk): Dropout is identity in eval mode; training-mode dropout with
    # pltpu.prng_seed / prng_random_bits could be added if needed.

    # Residual add (f32).
    y = y + res_ref[...].astype(jnp.float32)

    # LayerNorm over the last (hidden) dim, f32 math, biased variance.
    mean = jnp.mean(y, axis=-1, keepdims=True)
    centered = y - mean
    var = jnp.mean(centered * centered, axis=-1, keepdims=True)
    inv = jax.lax.rsqrt(var + eps)                 # EUP rsqrt (one per row)
    norm = centered * inv

    gamma = g_ref[...].astype(jnp.float32)         # [1, H]
    beta = beta_ref[...].astype(jnp.float32)       # [1, H]
    o_ref[...] = (norm * gamma + beta).astype(o_ref.dtype)


def _pick_tm(rows, itemsize):
    # ~512 f32 rows / ~1024 bf16 rows keeps the per-step slabs near the HBM
    # roofline sweet spot and well inside v7x's 64 MiB VMEM; multiples of 128
    # for clean MXU / lane tiling.  Small inputs use a single full-array tile.
    base = 1024 if itemsize <= 2 else 512
    return rows if rows <= base else base


@functools.partial(jax.jit, static_argnames=("eps", "tm"))
def visual_bert_self_output(hidden_states, input_tensor, dense_w_t, dense_b,
                            ln_gamma, ln_beta, *, eps=1e-12, tm=None):
    """hidden_states, input_tensor: [B, S, H]; dense_w_t: [H_in, H_out]
    (PyTorch weight transposed once at load time); dense_b/ln_gamma/ln_beta: [H].
    """
    B, S, H = hidden_states.shape
    rows = B * S
    hs2d = hidden_states.reshape(rows, H)
    res2d = input_tensor.reshape(rows, H)
    b2d = dense_b.reshape(1, H)
    g2d = ln_gamma.reshape(1, H)
    beta2d = ln_beta.reshape(1, H)

    in_bytes = jnp.dtype(hidden_states.dtype).itemsize
    if tm is None:
        tm = _pick_tm(rows, in_bytes)
    grid = (pl.cdiv(rows, tm),)

    # Explicit VMEM budget: 2x-buffered hs/res/out row slabs + single-copy
    # resident params + f32 temporaries headroom.  Floor at 32 MiB (safe on
    # all generations), cap below the v7x per-core physical limit.
    w_bytes = jnp.dtype(dense_w_t.dtype).itemsize
    tile_bytes = tm * H * in_bytes
    resident_bytes = (H * H + 3 * H) * w_bytes
    acc_bytes = tm * H * 4
    vmem_limit = int(min(96 * 2**20,
                         max(32 * 2**20,
                             3 * 2 * tile_bytes + resident_bytes
                             + 2 * acc_bytes + (2 << 20))))

    cost = pl.CostEstimate(
        flops=2 * rows * H * H,
        transcendentals=rows,                       # one rsqrt per row
        bytes_accessed=(3 * rows * H * in_bytes
                        + (H * H + 3 * H) * w_bytes))

    kernel = functools.partial(_self_output_kernel, eps=eps)

    # Whole-array VMEM residents: single copy, no per-step re-DMA and no
    # 2-deep pipeline duplication of the [H, H] weight.
    resident = pl.BlockSpec(memory_space=pltpu.MemorySpace.VMEM)

    out2d = pl.pallas_call(
        kernel,
        out_shape=jax.ShapeDtypeStruct((rows, H), hidden_states.dtype),
        grid_spec=pltpu.PrefetchScalarGridSpec(
            num_scalar_prefetch=0,
            grid=grid,
            in_specs=[
                pl.BlockSpec((tm, H), lambda i: (i, 0)),   # hidden_states rows
                pl.BlockSpec((tm, H), lambda i: (i, 0)),   # residual rows
                resident,                                  # weight [H, H]
                resident,                                  # bias   [1, H]
                resident,                                  # gamma  [1, H]
                resident,                                  # beta   [1, H]
            ],
            out_specs=pl.BlockSpec((tm, H), lambda i: (i, 0)),
        ),
        compiler_params=pltpu.CompilerParams(
            dimension_semantics=("parallel",),
            vmem_limit_bytes=vmem_limit),
        cost_estimate=cost,
    )(hs2d, res2d, dense_w_t, b2d, g2d, beta2d)

    return out2d.reshape(B, S, H)


def _reference(hidden_states, input_tensor, dense_w, dense_b, ln_gamma,
               ln_beta, eps=1e-12):
    y = hidden_states @ dense_w.T + dense_b
    y = y + input_tensor
    mean = jnp.mean(y, axis=-1, keepdims=True)
    var = jnp.mean((y - mean) ** 2, axis=-1, keepdims=True)
    return (y - mean) * jax.lax.rsqrt(var + eps) * ln_gamma + ln_beta


if __name__ == "__main__":
    key = jax.random.PRNGKey(0)

    # --- Small correctness check (module-consistent tiny shapes) ---
    B, S, H = 2, 8, 32
    k1, k2, k3, k4 = jax.random.split(key, 4)
    hidden_states = jax.random.normal(k1, (B, S, H), dtype=jnp.float32)
    input_tensor = jax.random.normal(k2, (B, S, H), dtype=jnp.float32)
    dense_w = jax.random.normal(k3, (H, H), dtype=jnp.float32) * 0.02
    dense_b = jax.random.normal(k4, (H,), dtype=jnp.float32) * 0.02
    ln_gamma = jnp.ones((H,), dtype=jnp.float32)
    ln_beta = jnp.zeros((H,), dtype=jnp.float32)

    # Weight transpose hoisted out of the per-call path (done once at load).
    dense_w_t = jnp.asarray(dense_w.T)

    out = visual_bert_self_output(hidden_states, input_tensor, dense_w_t,
                                  dense_b, ln_gamma, ln_beta)
    out = jax.block_until_ready(out)
    ref = _reference(hidden_states, input_tensor, dense_w, dense_b, ln_gamma,
                     ln_beta)
    assert out.shape == (B, S, H)
    assert jnp.allclose(out, ref, atol=1e-5, rtol=1e-5), "f32 small mismatch"

    # --- Larger tiled case: exercises multi-step grid / double buffering ---
    B2, S2, H2 = 4, 512, 256        # rows = 2048 -> 4 grid steps at tm=512 f32
    j1, j2, j3, j4 = jax.random.split(jax.random.PRNGKey(1), 4)
    hs_b = jax.random.normal(j1, (B2, S2, H2), dtype=jnp.float32)
    res_b = jax.random.normal(j2, (B2, S2, H2), dtype=jnp.float32)
    w_b = jax.random.normal(j3, (H2, H2), dtype=jnp.float32) * 0.02
    bias_b = jax.random.normal(j4, (H2,), dtype=jnp.float32) * 0.02
    g_b = jnp.ones((H2,), dtype=jnp.float32)
    be_b = jnp.zeros((H2,), dtype=jnp.float32)

    out_b = jax.block_until_ready(
        visual_bert_self_output(hs_b, res_b, jnp.asarray(w_b.T), bias_b,
                                g_b, be_b))
    ref_b = _reference(hs_b, res_b, w_b, bias_b, g_b, be_b)
    assert jnp.allclose(out_b, ref_b, atol=2e-2, rtol=2e-2), "f32 tiled mismatch"

    # --- bf16 storage path (native bf16 MXU, f32 accumulation) ---
    hs16 = hs_b.astype(jnp.bfloat16)
    res16 = res_b.astype(jnp.bfloat16)
    w16 = w_b.astype(jnp.bfloat16)
    out16 = jax.block_until_ready(
        visual_bert_self_output(hs16, res16, jnp.asarray(w16.T),
                                bias_b.astype(jnp.bfloat16),
                                g_b.astype(jnp.bfloat16),
                                be_b.astype(jnp.bfloat16)))
    ref16 = _reference(hs16.astype(jnp.float32), res16.astype(jnp.float32),
                       w16.astype(jnp.float32), bias_b, g_b, be_b)
    assert out16.dtype == jnp.bfloat16
    assert jnp.allclose(out16.astype(jnp.float32), ref16,
                        atol=3e-2, rtol=3e-2), "bf16 mismatch"

    print("KERNEL_OK")
</pallas_src>

<mosaic_0001>
module attributes {stable_mosaic.version = 11 : i64} {
  func.func @_self_output_kernel(%arg0: i32, %arg1: memref<16x32xf32, #tpu.memory_space<vmem>>, %arg2: memref<16x32xf32, #tpu.memory_space<vmem>>, %arg3: memref<32x32xf32, #tpu.memory_space<vmem>>, %arg4: memref<1x32xf32, #tpu.memory_space<vmem>>, %arg5: memref<1x32xf32, #tpu.memory_space<vmem>>, %arg6: memref<1x32xf32, #tpu.memory_space<vmem>>, %arg7: memref<16x32xf32, #tpu.memory_space<vmem>>) attributes {dimension_semantics = [#tpu.dimension_semantics<parallel>], iteration_bounds = array<i64: 1>, scalar_prefetch = 0 : i64, scratch_operands = 0 : i64, tpu.core_type = #tpu.core_type<tc>, window_params = [{transform_indices = @transform_0, window_bounds = array<i64: 16, 32>}, {transform_indices = @transform_1, window_bounds = array<i64: 16, 32>}, {pipeline_mode = #tpu.pipeline_mode<synchronous>, transform_indices = @transform_2, window_bounds = array<i64: 32, 32>}, {pipeline_mode = #tpu.pipeline_mode<synchronous>, transform_indices = @transform_3, window_bounds = array<i64: 1, 32>}, {pipeline_mode = #tpu.pipeline_mode<synchronous>, transform_indices = @transform_4, window_bounds = array<i64: 1, 32>}, {pipeline_mode = #tpu.pipeline_mode<synchronous>, transform_indices = @transform_5, window_bounds = array<i64: 1, 32>}, {transform_indices = @transform_6, window_bounds = array<i64: 16, 32>}]} {
    %c0 = arith.constant 0 : index
    %c0_0 = arith.constant 0 : index
    %0 = vector.load %arg1[%c0, %c0_0] : memref<16x32xf32, #tpu.memory_space<vmem>>, vector<16x32xf32>
    %c0_1 = arith.constant 0 : index
    %c0_2 = arith.constant 0 : index
    %1 = vector.load %arg3[%c0_1, %c0_2] : memref<32x32xf32, #tpu.memory_space<vmem>>, vector<32x32xf32>
    %cst = arith.constant dense<0.000000e+00> : vector<16x32xf32>
    %2 = tpu.matmul %0, %1, %cst {dimension_numbers = #tpu.dot_dimension_numbers<[1], [0], [0], [1], [0, 0, 1, 1], [], []>} : vector<16x32xf32>, vector<32x32xf32>, vector<16x32xf32> -> vector<16x32xf32>
    %c0_3 = arith.constant 0 : index
    %c0_4 = arith.constant 0 : index
    %3 = vector.load %arg4[%c0_3, %c0_4] : memref<1x32xf32, #tpu.memory_space<vmem>>, vector<1x32xf32>
    %4 = vector.broadcast %3 : vector<1x32xf32> to vector<16x32xf32>
    %5 = arith.addf %2, %4 : vector<16x32xf32>
    %c0_5 = arith.constant 0 : index
    %c0_6 = arith.constant 0 : index
    %6 = vector.load %arg2[%c0_5, %c0_6] : memref<16x32xf32, #tpu.memory_space<vmem>>, vector<16x32xf32>
    %7 = arith.addf %5, %6 : vector<16x32xf32>
    %cst_7 = arith.constant dense<0.000000e+00> : vector<16xf32>
    %8 = vector.multi_reduction <add>, %7, %cst_7 [1] : vector<16x32xf32> to vector<16xf32>
    %9 = vector.shape_cast %8 : vector<16xf32> to vector<16x1xf32>
    %cst_8 = arith.constant 3.200000e+01 : f32
    %10 = vector.broadcast %cst_8 : f32 to vector<16x1xf32>
    %11 = arith.divf %9, %10 : vector<16x1xf32>
    %12 = vector.broadcast %11 : vector<16x1xf32> to vector<16x32xf32>
    %13 = arith.subf %7, %12 : vector<16x32xf32>
    %14 = arith.mulf %13, %13 : vector<16x32xf32>
    %cst_9 = arith.constant dense<0.000000e+00> : vector<16xf32>
    %15 = vector.multi_reduction <add>, %14, %cst_9 [1] : vector<16x32xf32> to vector<16xf32>
    %16 = vector.shape_cast %15 : vector<16xf32> to vector<16x1xf32>
    %cst_10 = arith.constant 3.200000e+01 : f32
    %17 = vector.broadcast %cst_10 : f32 to vector<16x1xf32>
    %18 = arith.divf %16, %17 : vector<16x1xf32>
    %cst_11 = arith.constant 9.99999996E-13 : f32
    %19 = vector.broadcast %cst_11 : f32 to vector<16x1xf32>
    %20 = arith.addf %18, %19 : vector<16x1xf32>
    %21 = math.rsqrt %20 : vector<16x1xf32>
    %22 = vector.broadcast %21 : vector<16x1xf32> to vector<16x32xf32>
    %23 = arith.mulf %13, %22 : vector<16x32xf32>
    %c0_12 = arith.constant 0 : index
    %c0_13 = arith.constant 0 : index
    %24 = vector.load %arg5[%c0_12, %c0_13] : memref<1x32xf32, #tpu.memory_space<vmem>>, vector<1x32xf32>
    %c0_14 = arith.constant 0 : index
    %c0_15 = arith.constant 0 : index
    %25 = vector.load %arg6[%c0_14, %c0_15] : memref<1x32xf32, #tpu.memory_space<vmem>>, vector<1x32xf32>
    %26 = vector.broadcast %24 : vector<1x32xf32> to vector<16x32xf32>
    %27 = arith.mulf %23, %26 : vector<16x32xf32>
    %28 = vector.broadcast %25 : vector<1x32xf32> to vector<16x32xf32>
    %29 = arith.addf %27, %28 : vector<16x32xf32>
    %c0_16 = arith.constant 0 : index
    %c0_17 = arith.constant 0 : index
    %30 = vector.load %arg7[%c0_16, %c0_17] : memref<16x32xf32, #tpu.memory_space<vmem>>, vector<16x32xf32>
    tpu.vector_store %arg7[%c0_16, %c0_17], %29 {strides = array<i32>} : memref<16x32xf32, #tpu.memory_space<vmem>>, vector<16x32xf32>,
    return
  }
  func.func @transform_0(%arg0: i32) -> (i32, i32) {
    %c0_i32 = arith.constant 0 : i32
    %c0_i32_0 = arith.constant 0 : i32
    return %arg0, %c0_i32 : i32, i32
  }
  func.func @transform_1(%arg0: i32) -> (i32, i32) {
    %c0_i32 = arith.constant 0 : i32
    %c0_i32_0 = arith.constant 0 : i32
    return %arg0, %c0_i32 : i32, i32
  }
  func.func @transform_2(%arg0: i32) -> (i32, i32) {
    %c0_i32 = arith.constant 0 : i32
    %c0_i32_0 = arith.constant 0 : i32
    %c0_i32_1 = arith.constant 0 : i32
    return %c0_i32, %c0_i32_0 : i32, i32
  }
  func.func @transform_3(%arg0: i32) -> (i32, i32) {
    %c0_i32 = arith.constant 0 : i32
    %c0_i32_0 = arith.constant 0 : i32
    %c0_i32_1 = arith.constant 0 : i32
    return %c0_i32, %c0_i32_0 : i32, i32
  }
  func.func @transform_4(%arg0: i32) -> (i32, i32) {
    %c0_i32 = arith.constant 0 : i32
    %c0_i32_0 = arith.constant 0 : i32
    %c0_i32_1 = arith.constant 0 : i32
    return %c0_i32, %c0_i32_0 : i32, i32
  }
  func.func @transform_5(%arg0: i32) -> (i32, i32) {
    %c0_i32 = arith.constant 0 : i32
    %c0_i32_0 = arith.constant 0 : i32
    %c0_i32_1 = arith.constant 0 : i32
    return %c0_i32, %c0_i32_0 : i32, i32
  }
  func.func @transform_6(%arg0: i32) -> (i32, i32) {
    %c0_i32 = arith.constant 0 : i32
    %c0_i32_0 = arith.constant 0 : i32
    return %arg0, %c0_i32 : i32, i32
  }
}

</mosaic_0001>

<llo_original>
// kernel: visual_bert_self_output.1
$region0: #{visual_bert_self_output.1}
  #allocation0 [shape = 'u32[]', space=smem, size = 0x4, offset = 0x4, fixed_abs, tag = 'smem constant byte address 0x4 - core index']
  #allocation1 [shape = 'u32[144,128]{1,0:T(1,128)}', space=vmem, size = 0x12000, scoped, tag = 'internal scratch']
  %s0 = inlined_call_operand.vmem [shape: f32[16,32], index: 0, kind: input, shape index: {}]
  %s1 = inlined_call_operand.hbm [shape: f32[16,32], index: 1, kind: input, shape index: {}]
  %s2 = inlined_call_operand.hbm [shape: f32[32,32], index: 2, kind: input, shape index: {}]
  %s3 = inlined_call_operand.vmem [shape: f32[1,32], index: 3, kind: input, shape index: {}]
  %s4 = inlined_call_operand.vmem [shape: f32[1,32], index: 4, kind: input, shape index: {}]
  %s5 = inlined_call_operand.vmem [shape: f32[1,32], index: 5, kind: input, shape index: {}]
  %s6 = inlined_call_operand.hbm [shape: f32[16,32], index: 6, kind: output, shape index: {}]
  %s7 = sld [smem:[#allocation0]]
  $region42: #{visual_bert_self_output.1} parent=0
    _
  %s9 = ssub.s32 1, %s7
  %s10 = scalar_select 0, %s9, %s7
  $region1: #{visual_bert_self_output.1} parent=0
    #allocation2 [shape = 'u8[8192]{0}', space=vmem, size = 0x2000, scoped, tag = 'input window, operand 1, single buffered']
    #allocation3 [shape = 's32[1]{0}', space=sflag, size = 0x4, scoped, tag = 'scoped memory for visual_bert_self_output.1']
    #allocation4 [shape = 's32[1]{0}', space=sflag, size = 0x4, scoped, tag = 'scoped memory for visual_bert_self_output.1']
    #allocation5 [shape = 'u8[16384]{0}', space=vmem, size = 0x4000, scoped, tag = 'input window, operand 2, single buffered']
    #allocation6 [shape = 's32[1]{0}', space=sflag, size = 0x4, scoped, tag = 'scoped memory for visual_bert_self_output.1']
    #allocation7 [shape = 'u8[8192]{0}', space=vmem, size = 0x2000, scoped, tag = 'output window, operand 0, single buffered']
    %11 = vsyncpa [#allocation3], 0
    %12 = vsyncpa [#allocation6], 0
    %13 = vsyncpa [#allocation4], 0
    // Predicated region
    $region2: #{visual_bert_self_output.1} parent=1 // pred_check
      _
    $region3: #{visual_bert_self_output.1} parent=1 // pred_check_branch
      %15 = sbr.rel (0) target = $region5
    $region4: #{visual_bert_self_output.1} parent=1 // pred_region
      _
    $region5: #{visual_bert_self_output.1} parent=1 // pred_fallthru
      _
    // Predicated region
    $region6: #{visual_bert_self_output.1} parent=1 // pred_check
      _
    $region7: #{visual_bert_self_output.1} parent=1 // pred_check_branch
      %17 = sbr.rel (0) target = $region9
    $region8: #{visual_bert_self_output.1} parent=1 // pred_region
      %s19 = ssub.s32 256, 256
      %20 = vsyncadd [#allocation3], %s19
      %s21 = sshll.u32 [#allocation2], 4
      %s22 = int_to_ptr.vmem [resolvable:$true] %s21
      %27 = dma.hbm_to_vmem [thread:$0]  %s1, 256, %s22, [#allocation3], 128, 128, 8
    $region9: #{visual_bert_self_output.1} parent=1 // pred_fallthru
      _
    // Predicated region
    $region10: #{visual_bert_self_output.1} parent=1 // pred_check
      _
    $region11: #{visual_bert_self_output.1} parent=1 // pred_check_branch
      %29 = sbr.rel (0) target = $region13
    $region12: #{visual_bert_self_output.1} parent=1 // pred_region
      %s31 = ssub.s32 512, 512
      %32 = vsyncadd [#allocation6], %s31
      %s33 = sshll.u32 [#allocation5], 4
      %s34 = int_to_ptr.vmem [resolvable:$true] %s33
      %39 = dma.hbm_to_vmem [thread:$0]  %s2, 512, %s34, [#allocation6], 128, 128, 8
    $region13: #{visual_bert_self_output.1} parent=1 // pred_fallthru
      _
    // Predicated region
    $region14: #{visual_bert_self_output.1} parent=1 // pred_check
      _
    $region15: #{visual_bert_self_output.1} parent=1 // pred_check_branch
      %41 = sbr.rel (0) target = $region17
    $region16: #{visual_bert_self_output.1} parent=1 // pred_region
      _
    $region17: #{visual_bert_self_output.1} parent=1 // pred_fallthru
      _
    // Predicated region
    $region18: #{visual_bert_self_output.1} parent=1 // pred_check
      _
    $region19: #{visual_bert_self_output.1} parent=1 // pred_check_branch
      %43 = sbr.rel (0) target = $region21
    $region20: #{visual_bert_self_output.1} parent=1 // pred_region
      _
    $region21: #{visual_bert_self_output.1} parent=1 // pred_fallthru
      _
    // Predicated region
    $region22: #{visual_bert_self_output.1} parent=1 // pred_check
      _
    $region23: #{visual_bert_self_output.1} parent=1 // pred_check_branch
      %45 = sbr.rel (0) target = $region25
    $region24: #{visual_bert_self_output.1} parent=1 // pred_region
      _
    $region25: #{visual_bert_self_output.1} parent=1 // pred_fallthru
      _
    // Predicated region
    $region26: #{visual_bert_self_output.1} parent=1 // pred_check
      _
    $region27: #{visual_bert_self_output.1} parent=1 // pred_check_branch
      %47 = sbr.rel (0) target = $region29
    $region28: #{visual_bert_self_output.1} parent=1 // pred_region
      %48 = dma.done [#allocation3], 256
    $region29: #{visual_bert_self_output.1} parent=1 // pred_fallthru
      _
    // Predicated region
    $region30: #{visual_bert_self_output.1} parent=1 // pred_check
      _
    $region31: #{visual_bert_self_output.1} parent=1 // pred_check_branch
      %50 = sbr.rel (0) target = $region33
    $region32: #{visual_bert_self_output.1} parent=1 // pred_region
      %51 = dma.done [#allocation6], 512
    $region33: #{visual_bert_self_output.1} parent=1 // pred_fallthru
      _
    %v52 = vld [vmem:[%s0] sm:$0xff]
    %v53 = vld [vmem:[%s0 + $0x8] sm:$0xff]
    %v54 = vld [vmem:[#allocation5] sm:$0xff]
    %v55 = vld [vmem:[#allocation5 + $0x8] sm:$0xff]
    %v56 = vld [vmem:[#allocation5 + $0x10] sm:$0xff]
    %v57 = vld [vmem:[#allocation5 + $0x18] sm:$0xff]
    %v58 = vld [vmem:[%s3] sm:$0x1]
    %v60 = vlaneseq
    %v61 = vshrl.u32 %v60, 7
    %v62 = vsub.s32 0, %v61
    %v63 = vrot.slane %v58, %v62
    %vm65 = vcmask 261120
    %v67 = vsel %vm65, %v52, 0
    %v70 = vsel %vm65, %v53, 0
    %72 = vmatprep.subr.mxu0 0.0
    %73 = vmatpush1.msra.mxu0 %v54
    %74 = vmatprep.subr.mxu0 0.0
    %75 = vmatpush1.msra.mxu0 %v55
    %76 = vmatprep.subr.mxu0 0.0
    %77 = vmatpush1.msra.mxu0 %v56
    %78 = vmatprep.subr.mxu0 0.0
    %79 = vmatpush1.msra.mxu0 %v57
    %80 = vmatprep.subr.mxu0 0.0
    %81 = vmatpush1.msra.mxu0 0.0
    %82 = vmatprep.subr.mxu0 0.0
    %83 = vmatpush1.msra.mxu0 0.0
    %84 = vmatprep.subr.mxu0 0.0
    %85 = vmatpush1.msra.mxu0 0.0
    %86 = vmatprep.subr.mxu0 0.0
    %87 = vmatpush1.msra.mxu0 0.0
    %88 = vmatprep.subr.mxu0 0.0
    %89 = vmatpush1.msra.mxu0 0.0
    %90 = vmatprep.subr.mxu0 0.0
    %91 = vmatpush1.msra.mxu0 0.0
    %92 = vmatprep.subr.mxu0 0.0
    %93 = vmatpush1.msra.mxu0 0.0
    %94 = vmatprep.subr.mxu0 0.0
    %95 = vmatpush1.msra.mxu0 0.0
    %96 = vmatprep.subr.mxu0 0.0
    %97 = vmatpush1.msra.mxu0 0.0
    %98 = vmatprep.subr.mxu0 0.0
    %99 = vmatpush1.msra.mxu0 0.0
    %100 = vmatprep.subr.mxu0 0.0
    %101 = vmatpush1.msra.mxu0 0.0
    %102 = vmatprep.subr.mxu0 0.0
    %103 = vmatpush1.msra.mxu0 0.0
    %104 = vmatprep.subr.mxu0 0.0
    %105 = vmatpush1.msra.mxu0 0.0
    %106 = vmatprep.subr.mxu0 0.0
    %107 = vmatpush1.msra.mxu0 0.0
    %108 = vmatprep.subr.mxu0 0.0
    %109 = vmatpush1.msra.mxu0 0.0
    %110 = vmatprep.subr.mxu0 0.0
    %111 = vmatpush1.msra.mxu0 0.0
    %112 = vmatprep.subr.mxu0 0.0
    %113 = vmatpush1.msra.mxu0 0.0
    %114 = vmatprep.subr.mxu0 0.0
    %115 = vmatpush1.msra.mxu0 0.0
    %116 = vmatprep.subr.mxu0 0.0
    %117 = vmatpush1.msra.mxu0 0.0
    %118 = vmatprep.subr.mxu0 0.0
    %119 = vmatpush1.msra.mxu0 0.0
    %120 = vmatprep.subr.mxu0 0.0
    %121 = vmatpush1.msra.mxu0 0.0
    %122 = vmatprep.subr.mxu0 0.0
    %123 = vmatpush1.msra.mxu0 0.0
    %124 = vmatprep.subr.mxu0 0.0
    %125 = vmatpush1.msra.mxu0 0.0
    %126 = vmatprep.subr.mxu0 0.0
    %127 = vmatpush1.msra.mxu0 0.0
    %128 = vmatprep.subr.mxu0 0.0
    %129 = vmatpush1.msra.mxu0 0.0
    %130 = vmatprep.subr.mxu0 0.0
    %131 = vmatpush1.msra.mxu0 0.0
    %132 = vmatprep.subr.mxu0 0.0
    %133 = vmatpush1.msra.mxu0 0.0
    %134 = vmatprep.subr.mxu0 0.0
    %135 = vmatpush1.msra.mxu0 0.0
    %136 = vmatprep.mubr.f32.mxu0 0.0
    %137 = vmatmul.mubr.f32.gmra.mrb[0].mxu0 %v67
    %v138 = vpop.f32.mrb[0].mxu0
    %v139 = vadd.f32 %v63, %v138
    %v140 = vpop.f32.mrb[0].mxu0
    %141 = vmatprep.mubr.f32.mxu0 0.0
    %142 = vmatmul.mubr.f32.gmra.mrb[0].mxu0 %v70
    %v143 = vpop.f32.mrb[0].mxu0
    %v144 = vadd.f32 %v63, %v143
    %v145 = vpop.f32.mrb[0].mxu0
    %146 = vdwg.mxu0
    %v147 = vld [vmem:[#allocation2] sm:$0xff]
    %v148 = vld [vmem:[#allocation2 + $0x8] sm:$0xff]
    %v149 = vadd.f32 %v139, %v147
    %v150 = vadd.f32 %v144, %v148
    %v151 = vsel %vm65, %v149, 0.0
    %152 = vadd.xlane.f32.xlu0 %v151
    %v153 = vpop.xlane.xlu0 %152
    %v154 = vsel %vm65, %v150, 0.0
    %155 = vadd.xlane.f32.xlu0 %v154
    %v156 = vpop.xlane.xlu0 %155
    %v157 = vrcp.pop 32.0
    %v158 = vmul.f32 %v153, %v157
    %v159 = vmul.f32 %v156, %v157
    %v160 = vsub.f32 %v149, %v158
    %v161 = vsub.f32 %v150, %v159
    %v162 = vmul.f32 %v160, %v160
    %v163 = vmul.f32 %v161, %v161
    %v164 = vsel %vm65, %v162, 0.0
    %165 = vadd.xlane.f32.xlu0 %v164
    %v166 = vpop.xlane.xlu0 %165
    %v167 = vsel %vm65, %v163, 0.0
    %168 = vadd.xlane.f32.xlu0 %v167
    %v169 = vpop.xlane.xlu0 %168
    %v170 = vmul.f32 %v166, %v157
    %v171 = vmul.f32 %v169, %v157
    %v172 = vadd.f32 %v170, 1e-12
    %v173 = vadd.f32 %v171, 1e-12
    %v174 = vrsqrt.pop %v172
    %v175 = vrsqrt.pop %v173
    %v176 = vmul.f32 %v160, %v174
    %v177 = vmul.f32 %v161, %v175
    %v178 = vld [vmem:[%s4] sm:$0x1]
    %v179 = vld [vmem:[%s5] sm:$0x1]
    %v181 = vlaneseq
    %v182 = vshrl.u32 %v181, 7
    %v183 = vsub.s32 0, %v182
    %v184 = vrot.slane %v178, %v183
    %v186 = vmul.f32 %v176, %v184
    %v187 = vmul.f32 %v177, %v184
    %v189 = vlaneseq
    %v190 = vshrl.u32 %v189, 7
    %v191 = vsub.s32 0, %v190
    %v192 = vrot.slane %v179, %v191
    %v194 = vadd.f32 %v186, %v192
    %v195 = vadd.f32 %v187, %v192
    %196 = vst.msk [vmem:[#allocation7] sm:$0xff] %vm65, %v194
    %197 = vst.msk [vmem:[#allocation7 + $0x8] sm:$0xff] %vm65, %v195
    // Predicated region
    $region34: #{visual_bert_self_output.1} parent=1 // pred_check
      _
    $region35: #{visual_bert_self_output.1} parent=1 // pred_check_branch
      %199 = sbr.rel (0) target = $region37
    $region36: #{visual_bert_self_output.1} parent=1 // pred_region
      %s201 = ssub.s32 256, 256
      %202 = vsyncadd [#allocation4], %s201
      %s203 = sshll.u32 [#allocation7], 4
      %s204 = int_to_ptr.vmem [resolvable:$true] %s203
      %209 = dma.vmem_to_hbm [thread:$0]  %s204, 256, %s6, [#allocation4], 128, 128, 8
    $region37: #{visual_bert_self_output.1} parent=1 // pred_fallthru
      _
    // Predicated region
    $region38: #{visual_bert_self_output.1} parent=1 // pred_check
      _
    $region39: #{visual_bert_self_output.1} parent=1 // pred_check_branch
      %211 = sbr.rel (0) target = $region41
    $region40: #{visual_bert_self_output.1} parent=1 // pred_region
      %212 = dma.done [#allocation4], 256
    $region41: #{visual_bert_self_output.1} parent=1 // pred_fallthru
      _
    %213 = vsyncpa [#allocation3], 1
    %214 = vsyncpa [#allocation6], 1
    %215 = vsyncpa [#allocation4], 1

</llo_original>
